<compile_context>
chip_gen: v7x
topology: tpu7x:2x2x1
jax: 0.10.0
libtpu: 0.0.40
codegen_flags: <defaults>
</compile_context>

<pallas_src>
import functools
import math

import jax
import jax.numpy as jnp
from jax.experimental import pallas as pl
from jax.experimental.pallas import tpu as pltpu


_SQRT_2_OVER_PI = math.sqrt(2.0 / math.pi)
_C1 = _SQRT_2_OVER_PI                  # sqrt(2/pi)
_C2 = _SQRT_2_OVER_PI * 0.044715       # sqrt(2/pi) * 0.044715


def _gelu_kernel(x_ref, o_ref, *, compute_dtype):
    x = x_ref[...].astype(compute_dtype)
    # Strength-reduced tanh-GELU:
    #   inner = sqrt(2/pi) * (x + 0.044715 x^3) = x * (C1 + C2 * x^2)
    #   out   = x * (0.5 + 0.5 * tanh(inner))
    t = x * x
    inner = x * (_C1 + _C2 * t)
    out = x * (0.5 + 0.5 * jnp.tanh(inner))
    o_ref[...] = out.astype(o_ref.dtype)


def _round_up(a, b):
    return ((a + b - 1) // b) * b


def _ceil_div(a, b):
    return -(-a // b)


def _native_bf16_ok():
    """bf16 VPU/EUP exists on v6e and newer; keep f32 math on v5 and older."""
    try:
        kind = jax.devices()[0].device_kind.lower()
    except Exception:
        return False
    for old in ("v2", "v3", "v4", "v5"):
        if old in kind:
            return False
    return True


def _choose_slab(n, shape, pack, itemsize, max_cols):
    """Pick a lane-dense (rows, cols) layout; returns (rows, cols, pad_elems).

    pad_elems == 0 means the reshape is free (no data movement); only truly
    ragged sizes (n % 128 != 0 with an unaligned last dim) need a flat pad.
    """
    last = shape[-1] if len(shape) >= 1 else 1
    if (len(shape) >= 2
            and last % 128 == 0
            and pack * last * itemsize <= 8 * 1024 * 1024):
        cols, rows = last, n // last
    elif n % 128 == 0:
        cols, rows = 128, n // 128
    else:
        # Ragged tail: pad the flat view to a multiple of 128 (gelu(0) == 0).
        # TODO(synk): tail could be masked in-kernel (scalar-prefetch of n) to
        # avoid the extra HBM pass; padding kept for simplicity.
        cols = 128
        rows = _ceil_div(n, 128)
        return rows, cols, rows * cols - n
    # Widen the lane dim (free reshape) while keeping >= `pack` rows.
    while cols * 2 <= max_cols and rows % 2 == 0 and rows // 2 >= pack:
        cols *= 2
        rows //= 2
    return rows, cols, 0


def _plan_grid(rows, cols, pack, itemsize, target_block_bytes):
    """Choose block rows (tm) and grid length for the 1-D grid."""
    total_bytes = rows * cols * itemsize
    tm_target = max(pack, (target_block_bytes // (cols * itemsize)) // pack * pack)
    num_blocks = max(1, _ceil_div(rows, tm_target))
    if total_bytes > (1 << 20):
        # Keep the DMA/compute pipeline busy and split evenly across the two
        # v7x TensorCores: at least 4 steps, rounded to a multiple of 4 (2 for
        # very short slabs).  Per-step overhead is ~0.35 us, so this is free.
        num_blocks = max(num_blocks, 4)
    if num_blocks > 1:
        num_blocks = _round_up(num_blocks, 4 if rows >= 4 * pack else 2)
    num_blocks = min(num_blocks, max(1, _ceil_div(rows, pack)))
    tm = _round_up(_ceil_div(rows, num_blocks), pack)
    grid = _ceil_div(rows, tm)
    return tm, grid


def gelu_pallas(x, *, target_block_bytes=4 * 1024 * 1024, max_cols=2048):
    """Tanh-approximation GELU, elementwise, via a Pallas TPU kernel."""
    orig_shape = x.shape
    dtype = x.dtype
    n = x.size
    if n == 0:
        return x

    itemsize = jnp.dtype(dtype).itemsize
    # Sublane pack: 8 rows for 32-bit, 16 for 16-bit, 32 for 8-bit dtypes.
    pack = {4: 8, 2: 16, 1: 32}.get(itemsize, 8)

    rows, cols, pad = _choose_slab(n, orig_shape, pack, itemsize, max_cols)
    tm, grid = _plan_grid(rows, cols, pack, itemsize, target_block_bytes)

    if dtype == jnp.bfloat16 and _native_bf16_ok():
        compute_dtype = jnp.bfloat16
    else:
        compute_dtype = jnp.float32

    if pad:
        x2d = jnp.pad(x.reshape(-1), (0, pad)).reshape(rows, cols)
    else:
        x2d = x.reshape(rows, cols)

    out2d = pl.pallas_call(
        functools.partial(_gelu_kernel, compute_dtype=compute_dtype),
        out_shape=jax.ShapeDtypeStruct((rows, cols), dtype),
        grid_spec=pltpu.PrefetchScalarGridSpec(
            num_scalar_prefetch=0,
            grid=(grid,),
            in_specs=[pl.BlockSpec((tm, cols), lambda i: (i, 0))],
            out_specs=pl.BlockSpec((tm, cols), lambda i: (i, 0)),
        ),
        compiler_params=pltpu.CompilerParams(
            dimension_semantics=("parallel",),
            vmem_limit_bytes=32 * 1024 * 1024,
        ),
    )(x2d)

    if pad:
        return out2d.reshape(-1)[:n].reshape(orig_shape)
    return out2d.reshape(orig_shape)


def _gelu_ref(x):
    xf = x.astype(jnp.float32)
    out = 0.5 * xf * (1.0 + jnp.tanh(_SQRT_2_OVER_PI * (xf + 0.044715 * xf**3)))
    return out.astype(x.dtype)


if __name__ == "__main__":
    key = jax.random.PRNGKey(0)

    # Small shape consistent with a Linformer activation: (batch, seq, hidden).
    x = jax.random.normal(key, (2, 8, 32), dtype=jnp.float32)
    y = jax.block_until_ready(gelu_pallas(x))
    y_ref = _gelu_ref(x)
    assert y.shape == x.shape and y.dtype == x.dtype
    assert jnp.allclose(y, y_ref, atol=1e-5, rtol=1e-5)

    # 128-aligned last dim -> copy-free reshape, multi-block parallel grid.
    x2 = jax.random.normal(jax.random.PRNGKey(1), (3, 257, 384), dtype=jnp.float32)
    y2 = jax.block_until_ready(gelu_pallas(x2))
    y2_ref = _gelu_ref(x2)
    assert y2.shape == x2.shape and y2.dtype == x2.dtype
    assert jnp.allclose(y2, y2_ref, atol=1e-5, rtol=1e-5)

    # Truly ragged size -> padded fallback path.
    x3 = jax.random.normal(jax.random.PRNGKey(2), (5, 7, 11), dtype=jnp.float32)
    y3 = jax.block_until_ready(gelu_pallas(x3))
    y3_ref = _gelu_ref(x3)
    assert y3.shape == x3.shape and y3.dtype == x3.dtype
    assert jnp.allclose(y3, y3_ref, atol=1e-5, rtol=1e-5)

    print("KERNEL_OK")
</pallas_src>

<mosaic_0001>
module attributes {stable_mosaic.version = 11 : i64} {
  func.func @_gelu_kernel(%arg0: i32, %arg1: memref<8x128xf32, #tpu.memory_space<vmem>>, %arg2: memref<8x128xf32, #tpu.memory_space<vmem>>) attributes {dimension_semantics = [#tpu.dimension_semantics<parallel>], iteration_bounds = array<i64: 1>, scalar_prefetch = 0 : i64, scratch_operands = 0 : i64, tpu.core_type = #tpu.core_type<tc>, window_params = [{transform_indices = @transform_0, window_bounds = array<i64: 8, 128>}, {transform_indices = @transform_1, window_bounds = array<i64: 8, 128>}]} {
    %c0 = arith.constant 0 : index
    %c0_0 = arith.constant 0 : index
    %0 = vector.load %arg1[%c0, %c0_0] : memref<8x128xf32, #tpu.memory_space<vmem>>, vector<8x128xf32>
    %1 = arith.mulf %0, %0 : vector<8x128xf32>
    %cst = arith.constant 0.0356774069 : f32
    %2 = vector.broadcast %cst : f32 to vector<8x128xf32>
    %3 = arith.mulf %2, %1 : vector<8x128xf32>
    %cst_1 = arith.constant 0.797884583 : f32
    %4 = vector.broadcast %cst_1 : f32 to vector<8x128xf32>
    %5 = arith.addf %4, %3 : vector<8x128xf32>
    %6 = arith.mulf %0, %5 : vector<8x128xf32>
    %7 = math.tanh %6 : vector<8x128xf32>
    %cst_2 = arith.constant 5.000000e-01 : f32
    %8 = vector.broadcast %cst_2 : f32 to vector<8x128xf32>
    %9 = arith.mulf %8, %7 : vector<8x128xf32>
    %cst_3 = arith.constant 5.000000e-01 : f32
    %10 = vector.broadcast %cst_3 : f32 to vector<8x128xf32>
    %11 = arith.addf %10, %9 : vector<8x128xf32>
    %12 = arith.mulf %0, %11 : vector<8x128xf32>
    %c0_4 = arith.constant 0 : index
    %c0_5 = arith.constant 0 : index
    %13 = vector.load %arg2[%c0_4, %c0_5] : memref<8x128xf32, #tpu.memory_space<vmem>>, vector<8x128xf32>
    tpu.vector_store %arg2[%c0_4, %c0_5], %12 {strides = array<i32>} : memref<8x128xf32, #tpu.memory_space<vmem>>, vector<8x128xf32>,
    return
  }
  func.func @transform_0(%arg0: i32) -> (i32, i32) {
    %c0_i32 = arith.constant 0 : i32
    %c0_i32_0 = arith.constant 0 : i32
    return %arg0, %c0_i32 : i32, i32
  }
  func.func @transform_1(%arg0: i32) -> (i32, i32) {
    %c0_i32 = arith.constant 0 : i32
    %c0_i32_0 = arith.constant 0 : i32
    return %arg0, %c0_i32 : i32, i32
  }
}

</mosaic_0001>

<llo_original>
// kernel: tpu_custom_call.1
$region0: #{tpu_custom_call.1}
  #allocation0 [shape = 'u32[]', space=smem, size = 0x4, offset = 0x4, fixed_abs, tag = 'smem constant byte address 0x4 - core index']
  #allocation1 [shape = 'u32[144,128]{1,0:T(1,128)}', space=vmem, size = 0x12000, scoped, tag = 'internal scratch']
  %s0 = inlined_call_operand.hbm [shape: f32[4,128], index: 0, kind: input, shape index: {}]
  %s1 = inlined_call_operand.hbm [shape: f32[4,128], index: 1, kind: output, shape index: {}]
  %s2 = sld [smem:[#allocation0]]
  $region18: #{tpu_custom_call.1} parent=0
    _
  %s4 = ssub.s32 1, %s2
  %s5 = scalar_select 0, %s4, %s2
  $region1: #{tpu_custom_call.1} parent=0
    #allocation2 [shape = 'u8[4096]{0}', space=vmem, size = 0x1000, scoped, tag = 'input window, operand 0, single buffered']
    #allocation3 [shape = 's32[1]{0}', space=sflag, size = 0x4, scoped, tag = 'scoped memory for tpu_custom_call.1']
    #allocation4 [shape = 's32[1]{0}', space=sflag, size = 0x4, scoped, tag = 'scoped memory for tpu_custom_call.1']
    #allocation5 [shape = 'u8[4096]{0}', space=vmem, size = 0x1000, scoped, tag = 'output window, operand 0, single buffered']
    %6 = vsyncpa [#allocation3], 0
    %7 = vsyncpa [#allocation4], 0
    // Predicated region
    $region2: #{tpu_custom_call.1} parent=1 // pred_check
      _
    $region3: #{tpu_custom_call.1} parent=1 // pred_check_branch
      %9 = sbr.rel (0) target = $region5
    $region4: #{tpu_custom_call.1} parent=1 // pred_region
      %s11 = ssub.s32 128, 64
      %12 = vsyncadd [#allocation3], %s11
      %s13 = sshll.u32 [#allocation2], 4
      %s14 = int_to_ptr.vmem [resolvable:$true] %s13
      %19 = dma.hbm_to_vmem [thread:$0]  %s0, 64, %s14, [#allocation3], 64, 64, 4
    $region5: #{tpu_custom_call.1} parent=1 // pred_fallthru
      _
    // Predicated region
    $region6: #{tpu_custom_call.1} parent=1 // pred_check
      _
    $region7: #{tpu_custom_call.1} parent=1 // pred_check_branch
      %21 = sbr.rel (0) target = $region9
    $region8: #{tpu_custom_call.1} parent=1 // pred_region
      %22 = dma.done [#allocation3], 128
    $region9: #{tpu_custom_call.1} parent=1 // pred_fallthru
      _
    %v23 = vld [vmem:[#allocation2] sm:$0xff]
    %v24 = vmul.f32 %v23, %v23
    %v25 = vmul.f32 %v24, 0.035677407
    %v26 = vadd.f32 %v25, 0.7978846
    %v27 = vmul.f32 %v23, %v26
    %v28 = vtanh.pop %v27
    %v29 = vmul.f32 %v28, 0.5
    %v30 = vadd.f32 %v29, 0.5
    %v31 = vmul.f32 %v23, %v30
    %32 = vst [vmem:[#allocation5] sm:$0xff] %v31
    // Predicated region
    $region10: #{tpu_custom_call.1} parent=1 // pred_check
      _
    $region11: #{tpu_custom_call.1} parent=1 // pred_check_branch
      %34 = sbr.rel (0) target = $region13
    $region12: #{tpu_custom_call.1} parent=1 // pred_region
      %s36 = ssub.s32 128, 64
      %37 = vsyncadd [#allocation4], %s36
      %s38 = sshll.u32 [#allocation5], 4
      %s39 = int_to_ptr.vmem [resolvable:$true] %s38
      %44 = dma.vmem_to_hbm [thread:$0]  %s39, 64, %s1, [#allocation4], 64, 64, 4
    $region13: #{tpu_custom_call.1} parent=1 // pred_fallthru
      _
    // Predicated region
    $region14: #{tpu_custom_call.1} parent=1 // pred_check
      _
    $region15: #{tpu_custom_call.1} parent=1 // pred_check_branch
      %46 = sbr.rel (0) target = $region17
    $region16: #{tpu_custom_call.1} parent=1 // pred_region
      %47 = dma.done [#allocation4], 128
    $region17: #{tpu_custom_call.1} parent=1 // pred_fallthru
      _
    %48 = vsyncpa [#allocation3], 1
    %49 = vsyncpa [#allocation4], 1

</llo_original>
